<compile_context>
chip_gen: v7x
topology: tpu7x:2x2x1
jax: 0.10.0
libtpu: 0.0.40
codegen_flags: <defaults>
</compile_context>

<pallas_src>
import jax
import jax.numpy as jnp
from jax.experimental import pallas as pl
from jax.experimental.pallas import tpu as pltpu

NUM_OF_FILTERS = 16                 # stand-in for config.NUM_OF_FILTERS
INPUT_DIM = NUM_OF_FILTERS * 2      # = 32


def fm_kernel(b_ref, xt_ref, vwt_ref, v2_ref, o_ref):
    """One MXU matmul + VPU/XLU reductions; writes a lane-dense (1, N) row.

    b_ref   : (1, 1)   f32 in SMEM   — linear bias
    xt_ref  : (D, N)   f32 in VMEM   — x flattened and transposed
    vwt_ref : (D+1, D) f32 in VMEM   — [V^T ; w]  (fused interaction + linear RHS)
    v2_ref  : (D, 1)   f32 in VMEM   — row-sums of V**2
    o_ref   : (1, N)   f32 in VMEM
    """
    d = xt_ref.shape[0]

    xt = xt_ref[...]                 # (D, N)
    vwt = vwt_ref[...]               # (D+1, D)
    v2 = v2_ref[...]                 # (D, 1)
    bias = b_ref[0, 0]               # scalar from SMEM

    # Single fused matmul: rows 0..D-1 -> (x @ V)^T, row D -> (x @ w^T)^T
    r = jnp.dot(vwt, xt, preferred_element_type=jnp.float32)   # (D+1, N)
    xvt = r[:d, :]                   # (D, N)
    lin = r[d:, :]                   # (1, N)   linear part (no bias yet)

    # sum(ip1) = sum over all elements of (x @ V)^2
    sum_ip1 = jnp.sum(xvt * xvt)

    # sum(ip2) = sum_d (sum_n x[n,d]^2) * (sum_e V[d,e]^2)  -- no second GEMM
    sum_ip2 = jnp.sum((xt * xt) * v2)

    scalar = bias + 0.5 * sum_ip2 - sum_ip1
    o_ref[...] = lin + scalar        # lane-dense (1, N) store


def fm_layer_forward(x, w, b, V):
    """x: (B, S, D); w: (1, D); b: (1,); V: (D, D)  ->  (B*S, 1)."""
    B, S, D = x.shape
    N = B * S

    x32 = x.astype(jnp.float32)      # keep bf16 here if upstream is bf16 (v6e/v7x)
    V32 = V.astype(jnp.float32)
    w32 = w.astype(jnp.float32)

    # Pure layout / parameter plumbing (free relative to the kernel):
    xt = x32.reshape(N, D).T                         # (D, N)
    vwt = jnp.concatenate([V32.T, w32], axis=0)      # (D+1, D)
    v2 = jnp.sum(V32 * V32, axis=1, keepdims=True)   # (D, 1)
    b_sc = b.reshape(1, 1).astype(jnp.float32)       # SMEM scalar

    out_row = pl.pallas_call(
        fm_kernel,
        out_shape=jax.ShapeDtypeStruct((1, N), jnp.float32),
        grid_spec=pl.GridSpec(
            grid=(),
            in_specs=[
                pl.BlockSpec(memory_space=pltpu.MemorySpace.SMEM),  # bias
                pl.BlockSpec(memory_space=pltpu.MemorySpace.VMEM),  # xt
                pl.BlockSpec(memory_space=pltpu.MemorySpace.VMEM),  # [V^T; w]
                pl.BlockSpec(memory_space=pltpu.MemorySpace.VMEM),  # V^2 row-sums
            ],
            out_specs=pl.BlockSpec(memory_space=pltpu.MemorySpace.VMEM),
        ),
    )(b_sc, xt, vwt, v2)

    # torch .view(-1, 1): row n of out_row is flattened (b, s) index n.
    return out_row.reshape(-1, 1)


def fm_layer_reference(x, w, b, V):
    """Pure-JAX reference mirroring the PyTorch code."""
    linear_part = jnp.einsum("bsd,od->bso", x, w) + b.reshape(1, 1, 1)
    ip1 = jnp.einsum("bsd,de->bse", x, V) ** 2
    ip2 = jnp.einsum("bsd,de->bse", x ** 2, V ** 2)
    out = linear_part + jnp.sum(0.5 * ip2 - ip1)
    return out.reshape(-1, 1)


if __name__ == "__main__":
    key = jax.random.PRNGKey(0)
    kx, kw, kv = jax.random.split(key, 3)

    B, S, D = 2, 8, INPUT_DIM
    x = jax.random.normal(kx, (B, S, D), dtype=jnp.float32)

    # Parameters: shapes from FM_Layer.__init__ (Linear(D,1) weight/bias, V (D,D)).
    # The module loads zeros/ones — use small deterministic values so the kernel
    # exercises a non-trivial numeric path.
    w = 0.01 * jax.random.normal(kw, (1, D), dtype=jnp.float32)   # linear.weight
    b = jnp.ones((1,), dtype=jnp.float32)                         # linear.bias
    V = 0.01 * jax.random.normal(kv, (D, D), dtype=jnp.float32)   # self.V

    out = fm_layer_forward(x, w, b, V)
    jax.block_until_ready(out)

    ref = fm_layer_reference(x, w, b, V)
    assert out.shape == (B * S, 1), out.shape
    assert jnp.allclose(out, ref, atol=1e-4, rtol=1e-4), (out, ref)

    print("KERNEL_OK")
</pallas_src>

<mosaic_0001>
module attributes {stable_mosaic.version = 11 : i64} {
  func.func @fm_kernel(%arg0: memref<1x1xf32, #tpu.memory_space<smem>>, %arg1: memref<32x16xf32, #tpu.memory_space<vmem>>, %arg2: memref<33x32xf32, #tpu.memory_space<vmem>>, %arg3: memref<32x1xf32, #tpu.memory_space<vmem>>, %arg4: memref<1x16xf32, #tpu.memory_space<vmem>>) attributes {dimension_semantics = [], scalar_prefetch = 0 : i64, scratch_operands = 0 : i64, tpu.core_type = #tpu.core_type<tc>} {
    %c0 = arith.constant 0 : index
    %c0_0 = arith.constant 0 : index
    %0 = vector.load %arg1[%c0, %c0_0] : memref<32x16xf32, #tpu.memory_space<vmem>>, vector<32x16xf32>
    %c0_1 = arith.constant 0 : index
    %c0_2 = arith.constant 0 : index
    %1 = vector.load %arg2[%c0_1, %c0_2] : memref<33x32xf32, #tpu.memory_space<vmem>>, vector<33x32xf32>
    %c0_3 = arith.constant 0 : index
    %c0_4 = arith.constant 0 : index
    %2 = vector.load %arg3[%c0_3, %c0_4] : memref<32x1xf32, #tpu.memory_space<vmem>>, vector<32x1xf32>
    %c0_5 = arith.constant 0 : index
    %c0_6 = arith.constant 0 : index
    %3 = memref.load %arg0[%c0_5, %c0_6] : memref<1x1xf32, #tpu.memory_space<smem>>
    %cst = arith.constant dense<0.000000e+00> : vector<33x16xf32>
    %4 = tpu.matmul %1, %0, %cst {dimension_numbers = #tpu.dot_dimension_numbers<[1], [0], [0], [1], [0, 0, 1, 1], [], []>} : vector<33x32xf32>, vector<32x16xf32>, vector<33x16xf32> -> vector<33x16xf32>
    %5 = vector.extract_strided_slice %4 {offsets = [0, 0], sizes = [32, 16], strides = [1, 1]} : vector<33x16xf32> to vector<32x16xf32>
    %6 = vector.extract_strided_slice %4 {offsets = [32, 0], sizes = [1, 16], strides = [1, 1]} : vector<33x16xf32> to vector<1x16xf32>
    %7 = arith.mulf %5, %5 : vector<32x16xf32>
    %8 = vector.shape_cast %7 : vector<32x16xf32> to vector<1x32x16xf32>
    %cst_7 = arith.constant dense<0.000000e+00> : vector<1xf32>
    %9 = vector.multi_reduction <add>, %8, %cst_7 [1, 2] : vector<1x32x16xf32> to vector<1xf32>
    %10 = vector.shape_cast %9 : vector<1xf32> to vector<1x1x1xf32>
    %11 = vector.extract %10[0, 0, 0] : f32 from vector<1x1x1xf32>
    %12 = arith.mulf %0, %0 : vector<32x16xf32>
    %13 = vector.broadcast %2 : vector<32x1xf32> to vector<32x16xf32>
    %14 = arith.mulf %12, %13 : vector<32x16xf32>
    %15 = vector.shape_cast %14 : vector<32x16xf32> to vector<1x32x16xf32>
    %cst_8 = arith.constant dense<0.000000e+00> : vector<1xf32>
    %16 = vector.multi_reduction <add>, %15, %cst_8 [1, 2] : vector<1x32x16xf32> to vector<1xf32>
    %17 = vector.shape_cast %16 : vector<1xf32> to vector<1x1x1xf32>
    %18 = vector.extract %17[0, 0, 0] : f32 from vector<1x1x1xf32>
    %cst_9 = arith.constant 5.000000e-01 : f32
    %19 = arith.mulf %cst_9, %18 : f32
    %20 = arith.addf %3, %19 : f32
    %21 = arith.subf %20, %11 : f32
    %22 = vector.broadcast %21 : f32 to vector<1x16xf32>
    %23 = arith.addf %6, %22 : vector<1x16xf32>
    %c0_10 = arith.constant 0 : index
    %c0_11 = arith.constant 0 : index
    %24 = vector.load %arg4[%c0_10, %c0_11] : memref<1x16xf32, #tpu.memory_space<vmem>>, vector<1x16xf32>
    tpu.vector_store %arg4[%c0_10, %c0_11], %23 {strides = array<i32>} : memref<1x16xf32, #tpu.memory_space<vmem>>, vector<1x16xf32>,
    return
  }
}

</mosaic_0001>

<llo_original>
// kernel: tpu_custom_call.1
$region0: #{tpu_custom_call.1}
  #allocation0 [shape = 'u32[]', space=smem, size = 0x4, offset = 0x4, fixed_abs, tag = 'smem constant byte address 0x4 - core index']
  #allocation1 [shape = 'u32[144,128]{1,0:T(1,128)}', space=vmem, size = 0x12000, scoped, tag = 'internal scratch']
  #allocation2 [shape = 'f32[1,1]{1,0:T(1,128)S(6)}', space=smem, size = 0x200, scoped, tag = 'scoped memory for tpu_custom_call.1']
  %s0 = inlined_call_operand.<no memory space> [shape: f32[1,1], index: 0, kind: input, shape index: {}]
  %s1 = inlined_call_operand.vmem [shape: f32[32,16], index: 1, kind: input, shape index: {}]
  %s2 = inlined_call_operand.vmem [shape: f32[33,32], index: 2, kind: input, shape index: {}]
  %s3 = inlined_call_operand.vmem [shape: f32[32,1], index: 3, kind: input, shape index: {}]
  %s4 = inlined_call_operand.hbm [shape: f32[1,16], index: 4, kind: output, shape index: {}]
  %s5 = sld [smem:[#allocation0]]
  $region26: #{tpu_custom_call.1} parent=0
    _
  %s7 = ssub.s32 1, %s5
  %s8 = scalar_select 0, %s7, %s5
  %9 = sst [smem:[#allocation2]] %s0
  $region1: #{tpu_custom_call.1} parent=0
    #allocation3 [shape = 'u8[512]{0}', space=vmem, size = 0x400, scoped, tag = 'output window, operand 0, single buffered']
    #allocation4 [shape = 's32[1]{0}', space=sflag, size = 0x4, scoped, tag = 'scoped memory for tpu_custom_call.1']
    %10 = vsyncpa [#allocation4], 0
    // Predicated region
    $region2: #{tpu_custom_call.1} parent=1 // pred_check
      _
    $region3: #{tpu_custom_call.1} parent=1 // pred_check_branch
      %12 = sbr.rel (0) target = $region5
    $region4: #{tpu_custom_call.1} parent=1 // pred_region
      _
    $region5: #{tpu_custom_call.1} parent=1 // pred_fallthru
      _
    // Predicated region
    $region6: #{tpu_custom_call.1} parent=1 // pred_check
      _
    $region7: #{tpu_custom_call.1} parent=1 // pred_check_branch
      %14 = sbr.rel (0) target = $region9
    $region8: #{tpu_custom_call.1} parent=1 // pred_region
      _
    $region9: #{tpu_custom_call.1} parent=1 // pred_fallthru
      _
    // Predicated region
    $region10: #{tpu_custom_call.1} parent=1 // pred_check
      _
    $region11: #{tpu_custom_call.1} parent=1 // pred_check_branch
      %16 = sbr.rel (0) target = $region13
    $region12: #{tpu_custom_call.1} parent=1 // pred_region
      _
    $region13: #{tpu_custom_call.1} parent=1 // pred_fallthru
      _
    // Predicated region
    $region14: #{tpu_custom_call.1} parent=1 // pred_check
      _
    $region15: #{tpu_custom_call.1} parent=1 // pred_check_branch
      %18 = sbr.rel (0) target = $region17
    $region16: #{tpu_custom_call.1} parent=1 // pred_region
      _
    $region17: #{tpu_custom_call.1} parent=1 // pred_fallthru
      _
    %v19 = vld [vmem:[%s1] sm:$0xff]
    %v20 = vld [vmem:[%s1 + $0x8] sm:$0xff]
    %v21 = vld [vmem:[%s1 + $0x10] sm:$0xff]
    %v22 = vld [vmem:[%s1 + $0x18] sm:$0xff]
    %v23 = vld [vmem:[%s2] sm:$0xff]
    %v24 = vld [vmem:[%s2 + $0x8] sm:$0xff]
    %v25 = vld [vmem:[%s2 + $0x10] sm:$0xff]
    %v26 = vld [vmem:[%s2 + $0x18] sm:$0xff]
    %v27 = vld [vmem:[%s2 + $0x20] sm:$0x1]
    %v28 = vld [vmem:[%s3] sm:$0xff]
    %v29 = vld [vmem:[%s3 + $0x8] sm:$0xff]
    %v30 = vld [vmem:[%s3 + $0x10] sm:$0xff]
    %v31 = vld [vmem:[%s3 + $0x18] sm:$0xff]
    %s32 = sld [smem:[#allocation2]]
    %vm33 = vcmask 261120
    %v35 = vsel %vm33, %v23, 0
    %v38 = vsel %vm33, %v24, 0
    %v41 = vsel %vm33, %v25, 0
    %v44 = vsel %vm33, %v26, 0
    %v47 = vsel %vm33, %v27, 0
    %49 = vmatprep.subr.mxu0 0.0
    %50 = vmatpush1.msra.mxu0 %v19
    %51 = vmatprep.subr.mxu0 0.0
    %52 = vmatpush1.msra.mxu0 %v20
    %53 = vmatprep.subr.mxu0 0.0
    %54 = vmatpush1.msra.mxu0 %v21
    %55 = vmatprep.subr.mxu0 0.0
    %56 = vmatpush1.msra.mxu0 %v22
    %57 = vmatprep.subr.mxu0 0.0
    %58 = vmatpush1.msra.mxu0 0.0
    %59 = vmatprep.subr.mxu0 0.0
    %60 = vmatpush1.msra.mxu0 0.0
    %61 = vmatprep.subr.mxu0 0.0
    %62 = vmatpush1.msra.mxu0 0.0
    %63 = vmatprep.subr.mxu0 0.0
    %64 = vmatpush1.msra.mxu0 0.0
    %65 = vmatprep.subr.mxu0 0.0
    %66 = vmatpush1.msra.mxu0 0.0
    %67 = vmatprep.subr.mxu0 0.0
    %68 = vmatpush1.msra.mxu0 0.0
    %69 = vmatprep.subr.mxu0 0.0
    %70 = vmatpush1.msra.mxu0 0.0
    %71 = vmatprep.subr.mxu0 0.0
    %72 = vmatpush1.msra.mxu0 0.0
    %73 = vmatprep.subr.mxu0 0.0
    %74 = vmatpush1.msra.mxu0 0.0
    %75 = vmatprep.subr.mxu0 0.0
    %76 = vmatpush1.msra.mxu0 0.0
    %77 = vmatprep.subr.mxu0 0.0
    %78 = vmatpush1.msra.mxu0 0.0
    %79 = vmatprep.subr.mxu0 0.0
    %80 = vmatpush1.msra.mxu0 0.0
    %81 = vmatprep.subr.mxu0 0.0
    %82 = vmatpush1.msra.mxu0 0.0
    %83 = vmatprep.subr.mxu0 0.0
    %84 = vmatpush1.msra.mxu0 0.0
    %85 = vmatprep.subr.mxu0 0.0
    %86 = vmatpush1.msra.mxu0 0.0
    %87 = vmatprep.subr.mxu0 0.0
    %88 = vmatpush1.msra.mxu0 0.0
    %89 = vmatprep.subr.mxu0 0.0
    %90 = vmatpush1.msra.mxu0 0.0
    %91 = vmatprep.subr.mxu0 0.0
    %92 = vmatpush1.msra.mxu0 0.0
    %93 = vmatprep.subr.mxu0 0.0
    %94 = vmatpush1.msra.mxu0 0.0
    %95 = vmatprep.subr.mxu0 0.0
    %96 = vmatpush1.msra.mxu0 0.0
    %97 = vmatprep.subr.mxu0 0.0
    %98 = vmatpush1.msra.mxu0 0.0
    %99 = vmatprep.subr.mxu0 0.0
    %100 = vmatpush1.msra.mxu0 0.0
    %101 = vmatprep.subr.mxu0 0.0
    %102 = vmatpush1.msra.mxu0 0.0
    %103 = vmatprep.subr.mxu0 0.0
    %104 = vmatpush1.msra.mxu0 0.0
    %105 = vmatprep.subr.mxu0 0.0
    %106 = vmatpush1.msra.mxu0 0.0
    %107 = vmatprep.subr.mxu0 0.0
    %108 = vmatpush1.msra.mxu0 0.0
    %109 = vmatprep.subr.mxu0 0.0
    %110 = vmatpush1.msra.mxu0 0.0
    %111 = vmatprep.subr.mxu0 0.0
    %112 = vmatpush1.msra.mxu0 0.0
    %113 = vmatprep.mubr.f32.mxu0 0.0
    %114 = vmatmul.mubr.f32.gmra.mrb[0].mxu0 %v35
    %v115 = vpop.f32.mrb[0].mxu0
    %v116 = vadd.f32 0.0, %v115
    %v117 = vpop.f32.mrb[0].mxu0
    %118 = vmatprep.mubr.f32.mxu0 0.0
    %119 = vmatmul.mubr.f32.gmra.mrb[0].mxu0 %v38
    %v120 = vpop.f32.mrb[0].mxu0
    %v121 = vadd.f32 0.0, %v120
    %v122 = vpop.f32.mrb[0].mxu0
    %123 = vmatprep.mubr.f32.mxu0 0.0
    %124 = vmatmul.mubr.f32.gmra.mrb[0].mxu0 %v41
    %v125 = vpop.f32.mrb[0].mxu0
    %v126 = vadd.f32 0.0, %v125
    %v127 = vpop.f32.mrb[0].mxu0
    %128 = vmatprep.mubr.f32.mxu0 0.0
    %129 = vmatmul.mubr.f32.gmra.mrb[0].mxu0 %v44
    %v130 = vpop.f32.mrb[0].mxu0
    %v131 = vadd.f32 0.0, %v130
    %v132 = vpop.f32.mrb[0].mxu0
    %133 = vmatprep.mubr.f32.mxu0 0.0
    %134 = vmatmul.mubr.f32.gmra.mrb[0].mxu0 %v47
    %v135 = vpop.f32.mrb[0].mxu0
    %v136 = vadd.f32 0.0, %v135
    %v137 = vpop.f32.mrb[0].mxu0
    %138 = vdwg.mxu0
    %v139 = vmul.f32 %v116, %v116
    %v140 = vmul.f32 %v121, %v121
    %v141 = vmul.f32 %v126, %v126
    %v142 = vmul.f32 %v131, %v131
    %vm143 = vcmask 130048
    %v144 = vsel %vm143, %v139, 0.0
    %v145 = vsel %vm143, %v140, 0.0
    %v146 = vadd.f32 %v144, %v145
    %v147 = vsel %vm143, %v141, 0.0
    %v148 = vadd.f32 %v146, %v147
    %v149 = vsel %vm143, %v142, 0.0
    %v150 = vadd.f32 %v148, %v149
    %151 = vadd.xlane.f32.xlu0 %v150
    %v152 = vpop.xlane.xlu0 %151
    %v153 = vrot.slane %v152, 4
    %v154 = vadd.f32 %v152, %v153
    %v155 = vrot.slane %v154, 2
    %v156 = vadd.f32 %v154, %v155
    %v157 = vrot.slane %v156, 1
    %v158 = vadd.f32 %v156, %v157
    %s159 = vtos %v158
    %v160 = vmul.f32 %v19, %v19
    %v161 = vmul.f32 %v20, %v20
    %v162 = vmul.f32 %v21, %v21
    %v163 = vmul.f32 %v22, %v22
    %165 = vset.pattern.permute.xlu0 0
    %166 = vperm.xlu0 %165, %v28
    %v167 = vpop.permute.xlu0 %166
    %170 = vset.pattern.permute.xlu0 0
    %171 = vperm.xlu0 %170, %v29
    %v172 = vpop.permute.xlu0 %171
    %175 = vset.pattern.permute.xlu0 0
    %176 = vperm.xlu0 %175, %v30
    %v177 = vpop.permute.xlu0 %176
    %180 = vset.pattern.permute.xlu0 0
    %181 = vperm.xlu0 %180, %v31
    %v182 = vpop.permute.xlu0 %181
    %v184 = vmul.f32 %v160, %v167
    %v185 = vmul.f32 %v161, %v172
    %v186 = vmul.f32 %v162, %v177
    %v187 = vmul.f32 %v163, %v182
    %v188 = vsel %vm143, %v184, 0.0
    %v189 = vsel %vm143, %v185, 0.0
    %v190 = vadd.f32 %v188, %v189
    %v191 = vsel %vm143, %v186, 0.0
    %v192 = vadd.f32 %v190, %v191
    %v193 = vsel %vm143, %v187, 0.0
    %v194 = vadd.f32 %v192, %v193
    %195 = vadd.xlane.f32.xlu0 %v194
    %v196 = vpop.xlane.xlu0 %195
    %v197 = vrot.slane %v196, 4
    %v198 = vadd.f32 %v196, %v197
    %v199 = vrot.slane %v198, 2
    %v200 = vadd.f32 %v198, %v199
    %v201 = vrot.slane %v200, 1
    %v202 = vadd.f32 %v200, %v201
    %s203 = vtos %v202
    %s204 = smul.f32 %s203, 0.5
    %s205 = sadd.f32 %s32, %s204
    %s206 = ssub.f32 %s205, %s159
    %v207 = vstv %s206
    %v208 = vadd.f32 %v136, %v207
    %vm209 = vcmask 122880
    %210 = vst.msk [vmem:[#allocation3] sm:$0x1] %vm209, %v208
    // Predicated region
    $region18: #{tpu_custom_call.1} parent=1 // pred_check
      _
    $region19: #{tpu_custom_call.1} parent=1 // pred_check_branch
      %212 = sbr.rel (0) target = $region21
    $region20: #{tpu_custom_call.1} parent=1 // pred_region
      %s214 = ssub.s32 16, 16
      %215 = vsyncadd [#allocation4], %s214
      %s217 = sshll.u32 [#allocation3], 4
      %s218 = int_to_ptr.vmem [resolvable:$true] %s217
      %220 = dma.vmem_to_hbm [thread:$0]  %s218, 16, %s4, [#allocation4]
    $region21: #{tpu_custom_call.1} parent=1 // pred_fallthru
      _
    // Predicated region
    $region22: #{tpu_custom_call.1} parent=1 // pred_check
      _
    $region23: #{tpu_custom_call.1} parent=1 // pred_check_branch
      %222 = sbr.rel (0) target = $region25
    $region24: #{tpu_custom_call.1} parent=1 // pred_region
      %223 = dma.done [#allocation4], 16
    $region25: #{tpu_custom_call.1} parent=1 // pred_fallthru
      _
    %224 = vsyncpa [#allocation4], 1

</llo_original>
